<compile_context>
chip_gen: v5e
topology: v5e:2x2
jax: 0.10.0
libtpu: 0.0.40
codegen_flags: <defaults>
</compile_context>

<pallas_src>
import jax
import jax.numpy as jnp
from jax.experimental import pallas as pl
from jax.experimental.pallas import tpu as pltpu


def _elementwise_kernel(x_ref, o_ref):
    x = x_ref[...]
    # ((x + 2) - 1) * 3 / 2 -- pure VPU, single vreg pass.
    o_ref[...] = (x + 2.0 - 1.0) * 3.0 * 0.5


def pt_module_forward(x):
    """Elementwise forward matching PtModule: ((x + 2 - 1) * 3) / 2."""
    orig_shape = x.shape
    n = 1
    for d in orig_shape:
        n *= int(d)
    if n == 0:
        return x

    itemsize = jnp.dtype(x.dtype).itemsize
    # dtype-aware sublane granule (f32 -> 8, bf16/f16 -> 16, int8/fp8 -> 32)
    sub = {4: 8, 2: 16, 1: 32}.get(itemsize, 8)

    # Lane-dense width: prefer a multiple of 128 that divides n exactly so no
    # padding (and no post-slice) is needed at all.
    lane = None
    for cand in (4096, 2048, 1024, 512, 256, 128):
        if n % cand == 0:
            lane = cand
            break
    if lane is None:
        lane = 128  # only the sub-128 remainder (plus row rounding) gets padded

    row_bytes = lane * itemsize
    n_rows = -(-n // lane)
    total_bytes = n_rows * row_bytes

    single_block_bytes = 4 * 1024 * 1024   # whole array in one block when small
    target_block_bytes = 4 * 1024 * 1024   # ~4 MiB/block; 4x buffers ~= 16 MiB

    if total_bytes <= single_block_bytes:
        # One block covering the full array (exempt from (8,128) divisibility).
        tile_r = n_rows
        grid_r = 1
    else:
        tile_r = max(sub, (target_block_bytes // row_bytes) // sub * sub)
        tile_r = min(tile_r, n_rows)
        grid_r = -(-n_rows // tile_r)

    padded_rows = grid_r * tile_r
    padded_n = padded_rows * lane

    flat = x.reshape(-1)
    if padded_n != n:
        flat = jnp.pad(flat, (0, padded_n - n))
    x2d = flat.reshape(padded_rows, lane)

    out2d = pl.pallas_call(
        _elementwise_kernel,
        out_shape=jax.ShapeDtypeStruct((padded_rows, lane), x2d.dtype),
        grid_spec=pltpu.PrefetchScalarGridSpec(
            num_scalar_prefetch=0,
            grid=(grid_r,),
            in_specs=[pl.BlockSpec((tile_r, lane), lambda i: (i, 0))],
            out_specs=pl.BlockSpec((tile_r, lane), lambda i: (i, 0)),
        ),
        compiler_params=pltpu.CompilerParams(
            dimension_semantics=("parallel",),
            vmem_limit_bytes=32 * 1024 * 1024,  # safe on v5e/v6e/v7x
        ),
    )(x2d)

    out_flat = out2d.reshape(-1)
    if padded_n != n:
        out_flat = out_flat[:n]
    return out_flat.reshape(orig_shape)


if __name__ == "__main__":
    key = jax.random.PRNGKey(0)
    x = jax.random.normal(key, (2, 4, 16, 16), dtype=jnp.float32)

    fwd = jax.jit(pt_module_forward)
    y = jax.block_until_ready(fwd(x))

    # Reference check against plain JAX semantics of the PyTorch module.
    ref = ((x + 2.0 - 1.0) * 3.0) / 2.0
    assert y.shape == x.shape
    assert y.dtype == x.dtype
    assert jnp.allclose(y, ref, atol=1e-6, rtol=1e-6)

    print("KERNEL_OK")
</pallas_src>

<mosaic_0001>
module attributes {stable_mosaic.version = 11 : i64} {
  func.func @_elementwise_kernel(%arg0: i32, %arg1: memref<1x2048xf32, #tpu.memory_space<vmem>>, %arg2: memref<1x2048xf32, #tpu.memory_space<vmem>>) attributes {dimension_semantics = [#tpu.dimension_semantics<parallel>], iteration_bounds = array<i64: 1>, scalar_prefetch = 0 : i64, scratch_operands = 0 : i64, tpu.core_type = #tpu.core_type<tc>, window_params = [{transform_indices = @transform_0, window_bounds = array<i64: 1, 2048>}, {transform_indices = @transform_1, window_bounds = array<i64: 1, 2048>}]} {
    %c0 = arith.constant 0 : index
    %c0_0 = arith.constant 0 : index
    %0 = vector.load %arg1[%c0, %c0_0] : memref<1x2048xf32, #tpu.memory_space<vmem>>, vector<1x2048xf32>
    %cst = arith.constant 2.000000e+00 : f32
    %1 = vector.broadcast %cst : f32 to vector<1x2048xf32>
    %2 = arith.addf %0, %1 : vector<1x2048xf32>
    %cst_1 = arith.constant 1.000000e+00 : f32
    %3 = vector.broadcast %cst_1 : f32 to vector<1x2048xf32>
    %4 = arith.subf %2, %3 : vector<1x2048xf32>
    %cst_2 = arith.constant 3.000000e+00 : f32
    %5 = vector.broadcast %cst_2 : f32 to vector<1x2048xf32>
    %6 = arith.mulf %4, %5 : vector<1x2048xf32>
    %cst_3 = arith.constant 5.000000e-01 : f32
    %7 = vector.broadcast %cst_3 : f32 to vector<1x2048xf32>
    %8 = arith.mulf %6, %7 : vector<1x2048xf32>
    %c0_4 = arith.constant 0 : index
    %c0_5 = arith.constant 0 : index
    %9 = vector.load %arg2[%c0_4, %c0_5] : memref<1x2048xf32, #tpu.memory_space<vmem>>, vector<1x2048xf32>
    tpu.vector_store %arg2[%c0_4, %c0_5], %8 {strides = array<i32>} : memref<1x2048xf32, #tpu.memory_space<vmem>>, vector<1x2048xf32>,
    return
  }
  func.func @transform_0(%arg0: i32) -> (i32, i32) {
    %c0_i32 = arith.constant 0 : i32
    %c0_i32_0 = arith.constant 0 : i32
    return %arg0, %c0_i32 : i32, i32
  }
  func.func @transform_1(%arg0: i32) -> (i32, i32) {
    %c0_i32 = arith.constant 0 : i32
    %c0_i32_0 = arith.constant 0 : i32
    return %arg0, %c0_i32 : i32, i32
  }
}

</mosaic_0001>

<llo_original>
// kernel: pt_module_forward.1
$region0: #{pt_module_forward.1}
  #allocation0 [shape = 'u32[]', space=smem, size = 0x4, offset = 0x4, fixed_abs, tag = 'smem constant byte address 0x4 - core index']
  #allocation1 [shape = 'u32[72,128]{1,0:T(1,128)}', space=vmem, size = 0x9000, scoped, tag = 'internal scratch']
  %s0 = inlined_call_operand.vmem [shape: f32[1,2048], index: 0, kind: input, shape index: {}]
  %s1 = inlined_call_operand.vmem [shape: f32[1,2048], index: 1, kind: output, shape index: {}]
  %s2 = sld [smem:[#allocation0]]
  $region14: #{pt_module_forward.1} parent=0
    _
  %s4 = ssub.s32 1, %s2
  %s5 = scalar_select 0, %s4, %s2
  // Predicated region
  $region2: #{pt_module_forward.1} parent=0 // pred_check
    _
  $region3: #{pt_module_forward.1} parent=0 // pred_check_branch
    %7 = sbr.rel (0) target = $region5
  $region4: #{pt_module_forward.1} parent=0 // pred_region
    _
  $region5: #{pt_module_forward.1} parent=0 // pred_fallthru
    _
  %v8 = vld [vmem:[%s0] sm:$0xff]
  %v9 = vld [vmem:[%s0 + $0x8] sm:$0xff]
  %v10 = vadd.f32 %v8, 2.0
  %v11 = vadd.f32 %v9, 2.0
  %v12 = vsub.f32 %v10, 1.0
  %v13 = vsub.f32 %v11, 1.0
  %v14 = vmul.f32 %v12, 3.0
  %v15 = vmul.f32 %v13, 3.0
  %v16 = vmul.f32 %v14, 0.5
  %v17 = vmul.f32 %v15, 0.5
  %18 = vst [vmem:[%s1] sm:$0xff] %v16
  %19 = vst [vmem:[%s1 + $0x8] sm:$0xff] %v17
  // Predicated region
  $region6: #{pt_module_forward.1} parent=0 // pred_check
    _
  $region7: #{pt_module_forward.1} parent=0 // pred_check_branch
    %21 = sbr.rel (0) target = $region9
  $region8: #{pt_module_forward.1} parent=0 // pred_region
    _
  $region9: #{pt_module_forward.1} parent=0 // pred_fallthru
    _
  // Predicated region
  $region10: #{pt_module_forward.1} parent=0 // pred_check
    _
  $region11: #{pt_module_forward.1} parent=0 // pred_check_branch
    %23 = sbr.rel (0) target = $region13
  $region12: #{pt_module_forward.1} parent=0 // pred_region
    _
  $region13: #{pt_module_forward.1} parent=0 // pred_fallthru
    _

</llo_original>
